<compile_context>
chip_gen: v6e
topology: v6e:2x2x1
jax: 0.10.0
libtpu: 0.0.40
codegen_flags: <defaults>
</compile_context>

<pallas_src>
import functools

import jax
import jax.numpy as jnp
from jax.experimental import pallas as pl
from jax.experimental.pallas import tpu as pltpu


def _round_up(x, m):
    return ((x + m - 1) // m) * m


# ----------------------------------------------------------------------------
# Kernel 1: CLIP contrastive loss (tiled, online logsumexp)
# ----------------------------------------------------------------------------
def _clip_loss_kernel(scale_ref, img_ref, txt_ref, out_ref,
                      row_m, row_s, col_m, col_s, acc, *, batch):
    i = pl.program_id(0)           # row-tile index (image rows)
    j = pl.program_id(1)           # col-tile index (text rows)
    ni = pl.num_programs(0)
    nj = pl.num_programs(1)

    # sim[r, c] = scale * <img_r, txt_c>; contract the last dims directly so
    # the text tile never goes through an XLU transpose.  The logit_scale is
    # applied to the small [TB, TB] f32 result (cheaper than scaling the
    # [TB, D] operand when D > TB and keeps full f32 precision on the scale).
    sim = jax.lax.dot_general(
        img_ref[...], txt_ref[...],
        dimension_numbers=(((1,), (1,)), ((), ())),
        preferred_element_type=jnp.float32)                 # [TB, TB] f32
    sim = sim * scale_ref[0]
    tb = sim.shape[0]

    @pl.when(jnp.logical_and(i == 0, j == 0))
    def _():
        acc[0] = 0.0     # sum of row logsumexps
        acc[1] = 0.0     # sum of column logsumexps
        acc[2] = 0.0     # sum of diagonal logits
        out_ref[0, 0] = 0.0

    # ---- row-wise online LSE (state carried across the inner / column axis) ----
    @pl.when(j == 0)
    def _():
        row_m[...] = jnp.full_like(row_m, -jnp.inf)
        row_s[...] = jnp.zeros_like(row_s)

    t_row_max = jnp.max(sim, axis=1, keepdims=True)              # [TB, 1]
    r_new = jnp.maximum(row_m[...], t_row_max)
    row_s[...] = (row_s[...] * jnp.exp(row_m[...] - r_new)
                  + jnp.sum(jnp.exp(sim - r_new), axis=1, keepdims=True))
    row_m[...] = r_new

    @pl.when(j == nj - 1)
    def _():
        acc[0] += jnp.sum(jnp.log(row_s[...]) + row_m[...])

    # ---- column-wise online LSE (state carried across the outer / row axis) ----
    @pl.when(i == 0)
    def _():
        col_m[j] = jnp.full((1, tb), -jnp.inf, jnp.float32)
        col_s[j] = jnp.zeros((1, tb), jnp.float32)

    t_col_max = jnp.max(sim, axis=0, keepdims=True)               # [1, TB]
    cm_old = col_m[j]
    cm_new = jnp.maximum(cm_old, t_col_max)
    cs_new = (col_s[j] * jnp.exp(cm_old - cm_new)
              + jnp.sum(jnp.exp(sim - cm_new), axis=0, keepdims=True))
    col_m[j] = cm_new
    col_s[j] = cs_new

    @pl.when(i == ni - 1)
    def _():
        acc[1] += jnp.sum(jnp.log(cs_new) + cm_new)

    # ---- diagonal (ground-truth) logits: only on aligned blocks, reusing sim ----
    @pl.when(i == j)
    def _():
        rr = jax.lax.broadcasted_iota(jnp.int32, (tb, tb), 0)
        cc = jax.lax.broadcasted_iota(jnp.int32, (tb, tb), 1)
        acc[2] += jnp.sum(jnp.where(rr == cc, sim, 0.0))

    @pl.when(jnp.logical_and(i == ni - 1, j == nj - 1))
    def _():
        out_ref[0, 0] = (acc[0] + acc[1] - 2.0 * acc[2]) / (2.0 * batch)


def _pick_clip_tile(b, target=256):
    # Largest tile <= target that divides B and satisfies the (8,128) rule
    # (either a multiple of 8 or equal to the full batch).
    if b <= target:
        return b
    for tb in range(target - target % 8, 7, -8):
        if b % tb == 0:
            return tb
    return b


def clip_loss(image_features, text_features, logit_scale, *, block_b=256):
    B, D = image_features.shape
    tb = _pick_clip_tile(B, block_b)
    n_blk = B // tb
    scale = jnp.asarray(logit_scale, jnp.float32).reshape(1)

    grid_spec = pltpu.PrefetchScalarGridSpec(
        num_scalar_prefetch=0,
        grid=(n_blk, n_blk),
        in_specs=[
            pl.BlockSpec(memory_space=pltpu.SMEM),              # logit_scale
            pl.BlockSpec((tb, D), lambda i, j: (i, 0)),         # image row tile
            pl.BlockSpec((tb, D), lambda i, j: (j, 0)),         # text  col tile
        ],
        out_specs=pl.BlockSpec(memory_space=pltpu.SMEM),
        scratch_shapes=[
            pltpu.VMEM((tb, 1), jnp.float32),          # running row max
            pltpu.VMEM((tb, 1), jnp.float32),          # running row sum
            pltpu.VMEM((n_blk, 1, tb), jnp.float32),   # running col max per col block
            pltpu.VMEM((n_blk, 1, tb), jnp.float32),   # running col sum per col block
            pltpu.SMEM((3,), jnp.float32),             # [row_lse, col_lse, diag]
        ],
    )
    out = pl.pallas_call(
        functools.partial(_clip_loss_kernel, batch=B),
        out_shape=jax.ShapeDtypeStruct((1, 1), jnp.float32),
        grid_spec=grid_spec,
        compiler_params=pltpu.CompilerParams(
            # both axes carry accumulator state -> arbitrary
            dimension_semantics=("arbitrary", "arbitrary"),
            vmem_limit_bytes=32 * 1024 * 1024),
        cost_estimate=pl.CostEstimate(
            flops=2 * B * B * D + 10 * B * B,
            transcendentals=2 * B * B,
            bytes_accessed=2 * B * D * 4 * n_blk + 8),
    )(scale, image_features, text_features)
    return out[0, 0]


# ----------------------------------------------------------------------------
# Kernel 2: caption cross-entropy with ignore_index (pad_id), tiled over rows
# ----------------------------------------------------------------------------
def _caption_loss_kernel(logits_ref, labels_ref, out_ref, acc, *, pad_id):
    step = pl.program_id(0)
    n_steps = pl.num_programs(0)

    @pl.when(step == 0)
    def _():
        acc[0] = 0.0          # sum of per-token losses
        acc[1] = 0.0          # number of non-ignored tokens
        out_ref[0, 0] = 0.0

    x = logits_ref[...].astype(jnp.float32)        # [TN, V]
    lbl = labels_ref[...]                          # [TN, 1] int32
    tn, v = x.shape

    valid = lbl != pad_id                          # [TN, 1]

    row_max = jnp.max(x, axis=1, keepdims=True)
    sum_exp = jnp.sum(jnp.exp(x - row_max), axis=1, keepdims=True)
    lse = jnp.log(sum_exp) + row_max

    vocab_idx = jax.lax.broadcasted_iota(jnp.int32, (tn, v), 1)
    tgt = jnp.sum(jnp.where(vocab_idx == lbl, x, 0.0), axis=1, keepdims=True)

    acc[0] += jnp.sum(jnp.where(valid, lse - tgt, 0.0))
    acc[1] += jnp.sum(valid.astype(jnp.float32))

    @pl.when(step == n_steps - 1)
    def _():
        # NOTE: matches torch.nn.CrossEntropyLoss(ignore_index=pad_id): result
        # is NaN if every token is padding.
        out_ref[0, 0] = acc[0] / acc[1]


def _pick_caption_tile(n_rows, vocab, budget_bytes=16 * 1024 * 1024):
    # Keep the double-buffered f32 logits tile under the scoped-VMEM budget
    # (safe on v7x's 64 MiB VMEM as well).
    # TODO(synk): additionally tile the vocab axis with an online LSE when
    # V * 4B per row exceeds a few hundred KiB (very large vocabularies).
    max_rows = max(8, (budget_bytes // max(1, 2 * vocab * 4)) // 8 * 8)
    tile = min(512, max_rows)
    tile = min(tile, _round_up(n_rows, 8))
    return max(8, tile)


def caption_loss(logits, labels, pad_id, *, block_rows=None):
    B, T, V = logits.shape
    n = B * T
    tile_n = block_rows if block_rows is not None else _pick_caption_tile(n, V)
    n_pad = _round_up(n, tile_n)

    logits2d = logits.reshape(n, V)
    labels2d = labels.astype(jnp.int32).reshape(n, 1)
    if n_pad != n:
        # Padded rows carry label == pad_id -> masked exactly like ignore_index.
        logits2d = jnp.pad(logits2d, ((0, n_pad - n), (0, 0)))
        labels2d = jnp.pad(labels2d, ((0, n_pad - n), (0, 0)),
                           constant_values=pad_id)

    grid_spec = pltpu.PrefetchScalarGridSpec(
        num_scalar_prefetch=0,
        grid=(n_pad // tile_n,),
        in_specs=[
            pl.BlockSpec((tile_n, V), lambda i: (i, 0)),
            pl.BlockSpec((tile_n, 1), lambda i: (i, 0)),
        ],
        out_specs=pl.BlockSpec(memory_space=pltpu.SMEM),
        scratch_shapes=[pltpu.SMEM((2,), jnp.float32)],
    )
    out = pl.pallas_call(
        functools.partial(_caption_loss_kernel, pad_id=pad_id),
        out_shape=jax.ShapeDtypeStruct((1, 1), jnp.float32),
        grid_spec=grid_spec,
        # TODO(synk): on v7x, shard the row grid across both TensorCores with
        # per-core partial accumulators instead of one 'arbitrary' axis.
        compiler_params=pltpu.CompilerParams(
            dimension_semantics=("arbitrary",),
            vmem_limit_bytes=32 * 1024 * 1024),
        cost_estimate=pl.CostEstimate(
            flops=6 * n_pad * V,
            transcendentals=n_pad * V,
            bytes_accessed=n_pad * V * logits2d.dtype.itemsize + n_pad * 4 + 4),
    )(logits2d, labels2d)
    return out[0, 0]


# ----------------------------------------------------------------------------
# CoCaLoss forward (world_size == 1)
# ----------------------------------------------------------------------------
def coca_loss_forward(image_features, text_features, logits, labels, logit_scale,
                      caption_loss_weight, clip_loss_weight, pad_id=0):
    # TODO(synk): world_size > 1 gather_features path (ring all-gather via
    # make_async_remote_copy) is not implemented; single-device path only.
    if clip_loss_weight:
        cl = clip_loss_weight * clip_loss(image_features, text_features, logit_scale)
    else:
        cl = jnp.float32(0.0)
    cap = caption_loss_weight * caption_loss(logits, labels, pad_id)
    return cl, cap


# ----------------------------------------------------------------------------
# Reference (plain JAX) for sanity check
# ----------------------------------------------------------------------------
def _ref_coca(image_features, text_features, logits, labels, logit_scale,
              caption_loss_weight, clip_loss_weight, pad_id=0):
    sim = logit_scale * image_features @ text_features.T
    lse_r = jax.scipy.special.logsumexp(sim, axis=1)
    lse_c = jax.scipy.special.logsumexp(sim, axis=0)
    diag = jnp.diag(sim)
    ce_i = jnp.mean(lse_r - diag)
    ce_t = jnp.mean(lse_c - diag)
    cl = clip_loss_weight * (ce_i + ce_t) / 2.0

    Bc, T, V = logits.shape
    lg = logits.reshape(Bc * T, V)
    lab = labels.reshape(Bc * T)
    lse = jax.scipy.special.logsumexp(lg, axis=1)
    tgt = jnp.take_along_axis(lg, lab[:, None], axis=1)[:, 0]
    valid = (lab != pad_id)
    cap = caption_loss_weight * jnp.sum(jnp.where(valid, lse - tgt, 0.0)) / jnp.sum(valid)
    return cl, cap


if __name__ == "__main__":
    key = jax.random.PRNGKey(0)
    k1, k2, k3, k4 = jax.random.split(key, 4)

    B, D = 8, 32     # batch, embed dim
    T, V = 8, 128    # caption seq len, vocab size
    pad_id = 0
    caption_loss_weight = 2.0
    clip_loss_weight = 1.0

    image_features = jax.random.normal(k1, (B, D), dtype=jnp.float32)
    text_features = jax.random.normal(k2, (B, D), dtype=jnp.float32)
    cap_logits = jax.random.normal(k3, (B, T, V), dtype=jnp.float32)
    cap_labels = jax.random.randint(k4, (B, T), 0, V, dtype=jnp.int32)
    logit_scale = jnp.float32(2.6592)

    cl, cap = coca_loss_forward(image_features, text_features, cap_logits,
                                cap_labels, logit_scale,
                                caption_loss_weight, clip_loss_weight, pad_id)
    jax.block_until_ready((cl, cap))

    # sanity check against plain-JAX reference
    rcl, rcap = _ref_coca(image_features, text_features, cap_logits, cap_labels,
                          logit_scale, caption_loss_weight, clip_loss_weight, pad_id)
    assert jnp.allclose(cl, rcl, rtol=1e-4, atol=1e-4), (cl, rcl)
    assert jnp.allclose(cap, rcap, rtol=1e-4, atol=1e-4), (cap, rcap)

    print("KERNEL_OK")
</pallas_src>

<mosaic_0001>
module attributes {stable_mosaic.version = 11 : i64} {
  func.func @_clip_loss_kernel(%arg0: i32, %arg1: i32, %arg2: memref<1xf32, #tpu.memory_space<smem>>, %arg3: memref<8x32xf32, #tpu.memory_space<vmem>>, %arg4: memref<8x32xf32, #tpu.memory_space<vmem>>, %arg5: memref<1x1xf32, #tpu.memory_space<smem>>, %arg6: memref<8x1xf32, #tpu.memory_space<vmem>>, %arg7: memref<8x1xf32, #tpu.memory_space<vmem>>, %arg8: memref<1x1x8xf32, #tpu.memory_space<vmem>>, %arg9: memref<1x1x8xf32, #tpu.memory_space<vmem>>, %arg10: memref<3xf32, #tpu.memory_space<smem>>) attributes {dimension_semantics = [#tpu.dimension_semantics<arbitrary>, #tpu.dimension_semantics<arbitrary>], iteration_bounds = array<i64: 1, 1>, scalar_prefetch = 0 : i64, scratch_operands = 5 : i64, tpu.core_type = #tpu.core_type<tc>, window_params = [{transform_indices = @transform_0, window_bounds = array<i64: 1>}, {transform_indices = @transform_1, window_bounds = array<i64: 8, 32>}, {transform_indices = @transform_2, window_bounds = array<i64: 8, 32>}, {transform_indices = @transform_3, window_bounds = array<i64: 1, 1>}]} {
    %c0 = arith.constant 0 : index
    %c0_0 = arith.constant 0 : index
    %0 = vector.load %arg3[%c0, %c0_0] : memref<8x32xf32, #tpu.memory_space<vmem>>, vector<8x32xf32>
    %c0_1 = arith.constant 0 : index
    %c0_2 = arith.constant 0 : index
    %1 = vector.load %arg4[%c0_1, %c0_2] : memref<8x32xf32, #tpu.memory_space<vmem>>, vector<8x32xf32>
    %cst = arith.constant dense<0.000000e+00> : vector<8x8xf32>
    %2 = tpu.matmul %0, %1, %cst {dimension_numbers = #tpu.dot_dimension_numbers<[1], [1], [0], [0], [0, 0, 1, 0], [], []>} : vector<8x32xf32>, vector<8x32xf32>, vector<8x8xf32> -> vector<8x8xf32>
    %c0_3 = arith.constant 0 : index
    %3 = memref.load %arg2[%c0_3] : memref<1xf32, #tpu.memory_space<smem>>
    %4 = vector.broadcast %3 : f32 to vector<8x8xf32>
    %5 = arith.mulf %2, %4 : vector<8x8xf32>
    %c0_i32 = arith.constant 0 : i32
    %6 = arith.cmpi eq, %arg0, %c0_i32 : i32
    %c0_i32_4 = arith.constant 0 : i32
    %7 = arith.cmpi eq, %arg1, %c0_i32_4 : i32
    %8 = arith.andi %6, %7 : i1
    %9 = arith.extui %8 : i1 to i32
    %c0_i32_5 = arith.constant 0 : i32
    %10 = arith.cmpi ne, %9, %c0_i32_5 : i32
    scf.if %10 {
      %cst_40 = arith.constant 0.000000e+00 : f32
      %c0_41 = arith.constant 0 : index
      %74 = memref.load %arg10[%c0_41] : memref<3xf32, #tpu.memory_space<smem>>
      memref.store %cst_40, %arg10[%c0_41] : memref<3xf32, #tpu.memory_space<smem>>
      %cst_42 = arith.constant 0.000000e+00 : f32
      %c1 = arith.constant 1 : index
      %75 = memref.load %arg10[%c1] : memref<3xf32, #tpu.memory_space<smem>>
      memref.store %cst_42, %arg10[%c1] : memref<3xf32, #tpu.memory_space<smem>>
      %cst_43 = arith.constant 0.000000e+00 : f32
      %c2 = arith.constant 2 : index
      %76 = memref.load %arg10[%c2] : memref<3xf32, #tpu.memory_space<smem>>
      memref.store %cst_43, %arg10[%c2] : memref<3xf32, #tpu.memory_space<smem>>
      %cst_44 = arith.constant 0.000000e+00 : f32
      %c0_45 = arith.constant 0 : index
      %c0_46 = arith.constant 0 : index
      %77 = memref.load %arg5[%c0_45, %c0_46] : memref<1x1xf32, #tpu.memory_space<smem>>
      memref.store %cst_44, %arg5[%c0_45, %c0_46] : memref<1x1xf32, #tpu.memory_space<smem>>
    } else {
    }
    %c0_i32_6 = arith.constant 0 : i32
    %11 = arith.cmpi eq, %arg1, %c0_i32_6 : i32
    %12 = arith.extui %11 : i1 to i32
    %c0_i32_7 = arith.constant 0 : i32
    %13 = arith.cmpi ne, %12, %c0_i32_7 : i32
    scf.if %13 {
      %cst_40 = arith.constant 0xFF800000 : f32
      %74 = vector.broadcast %cst_40 : f32 to vector<8x1xf32>
      %c0_41 = arith.constant 0 : index
      %c0_42 = arith.constant 0 : index
      %75 = vector.load %arg6[%c0_41, %c0_42] : memref<8x1xf32, #tpu.memory_space<vmem>>, vector<8x1xf32>
      tpu.vector_store %arg6[%c0_41, %c0_42], %74 {strides = array<i32>} : memref<8x1xf32, #tpu.memory_space<vmem>>, vector<8x1xf32>,
      %cst_43 = arith.constant 0.000000e+00 : f32
      %76 = vector.broadcast %cst_43 : f32 to vector<8x1xf32>
      %c0_44 = arith.constant 0 : index
      %c0_45 = arith.constant 0 : index
      %77 = vector.load %arg7[%c0_44, %c0_45] : memref<8x1xf32, #tpu.memory_space<vmem>>, vector<8x1xf32>
      tpu.vector_store %arg7[%c0_44, %c0_45], %76 {strides = array<i32>} : memref<8x1xf32, #tpu.memory_space<vmem>>, vector<8x1xf32>,
    } else {
    }
    %cst_8 = arith.constant dense<0xFF800000> : vector<8xf32>
    %14 = vector.multi_reduction <maximumf>, %5, %cst_8 [1] : vector<8x8xf32> to vector<8xf32>
    %15 = vector.shape_cast %14 : vector<8xf32> to vector<8x1xf32>
    %c0_9 = arith.constant 0 : index
    %c0_10 = arith.constant 0 : index
    %16 = vector.load %arg6[%c0_9, %c0_10] : memref<8x1xf32, #tpu.memory_space<vmem>>, vector<8x1xf32>
    %17 = arith.maximumf %16, %15 : vector<8x1xf32>
    %c0_11 = arith.constant 0 : index
    %c0_12 = arith.constant 0 : index
    %18 = vector.load %arg7[%c0_11, %c0_12] : memref<8x1xf32, #tpu.memory_space<vmem>>, vector<8x1xf32>
    %c0_13 = arith.constant 0 : index
    %c0_14 = arith.constant 0 : index
    %19 = vector.load %arg6[%c0_13, %c0_14] : memref<8x1xf32, #tpu.memory_space<vmem>>, vector<8x1xf32>
    %20 = arith.subf %19, %17 : vector<8x1xf32>
    %21 = math.exp %20 : vector<8x1xf32>
    %22 = arith.mulf %18, %21 : vector<8x1xf32>
    %23 = vector.broadcast %17 : vector<8x1xf32> to vector<8x8xf32>
    %24 = arith.subf %5, %23 : vector<8x8xf32>
    %25 = math.exp %24 : vector<8x8xf32>
    %cst_15 = arith.constant dense<0.000000e+00> : vector<8xf32>
    %26 = vector.multi_reduction <add>, %25, %cst_15 [1] : vector<8x8xf32> to vector<8xf32>
    %27 = vector.shape_cast %26 : vector<8xf32> to vector<8x1xf32>
    %28 = arith.addf %22, %27 : vector<8x1xf32>
    %c0_16 = arith.constant 0 : index
    %c0_17 = arith.constant 0 : index
    %29 = vector.load %arg7[%c0_16, %c0_17] : memref<8x1xf32, #tpu.memory_space<vmem>>, vector<8x1xf32>
    tpu.vector_store %arg7[%c0_16, %c0_17], %28 {strides = array<i32>} : memref<8x1xf32, #tpu.memory_space<vmem>>, vector<8x1xf32>,
    %c0_18 = arith.constant 0 : index
    %c0_19 = arith.constant 0 : index
    %30 = vector.load %arg6[%c0_18, %c0_19] : memref<8x1xf32, #tpu.memory_space<vmem>>, vector<8x1xf32>
    tpu.vector_store %arg6[%c0_18, %c0_19], %17 {strides = array<i32>} : memref<8x1xf32, #tpu.memory_space<vmem>>, vector<8x1xf32>,
    %c0_i32_20 = arith.constant 0 : i32
    %31 = arith.cmpi eq, %arg1, %c0_i32_20 : i32
    %32 = arith.extui %31 : i1 to i32
    %c0_i32_21 = arith.constant 0 : i32
    %33 = arith.cmpi ne, %32, %c0_i32_21 : i32
    scf.if %33 {
      %c0_40 = arith.constant 0 : index
      %74 = memref.load %arg10[%c0_40] : memref<3xf32, #tpu.memory_space<smem>>
      %c0_41 = arith.constant 0 : index
      %c0_42 = arith.constant 0 : index
      %75 = vector.load %arg7[%c0_41, %c0_42] : memref<8x1xf32, #tpu.memory_space<vmem>>, vector<8x1xf32>
      %76 = math.log %75 : vector<8x1xf32>
      %c0_43 = arith.constant 0 : index
      %c0_44 = arith.constant 0 : index
      %77 = vector.load %arg6[%c0_43, %c0_44] : memref<8x1xf32, #tpu.memory_space<vmem>>, vector<8x1xf32>
      %78 = arith.addf %76, %77 : vector<8x1xf32>
      %79 = vector.shape_cast %78 : vector<8x1xf32> to vector<1x8x1xf32>
      %cst_45 = arith.constant dense<0.000000e+00> : vector<1xf32>
      %80 = vector.multi_reduction <add>, %79, %cst_45 [1, 2] : vector<1x8x1xf32> to vector<1xf32>
      %81 = vector.shape_cast %80 : vector<1xf32> to vector<1x1x1xf32>
      %82 = vector.extract %81[0, 0, 0] : f32 from vector<1x1x1xf32>
      %83 = arith.addf %74, %82 : f32
      %c0_46 = arith.constant 0 : index
      %84 = memref.load %arg10[%c0_46] : memref<3xf32, #tpu.memory_space<smem>>
      memref.store %83, %arg10[%c0_46] : memref<3xf32, #tpu.memory_space<smem>>
    } else {
    }
    %c0_i32_22 = arith.constant 0 : i32
    %34 = arith.cmpi eq, %arg0, %c0_i32_22 : i32
    %35 = arith.extui %34 : i1 to i32
    %c0_i32_23 = arith.constant 0 : i32
    %36 = arith.cmpi ne, %35, %c0_i32_23 : i32
    scf.if %36 {
      %cst_40 = arith.constant 0xFF800000 : f32
      %74 = vector.broadcast %cst_40 : f32 to vector<1x8xf32>
      %75 = arith.index_cast %arg1 : i32 to index
      %c0_41 = arith.constant 0 : index
      %c0_42 = arith.constant 0 : index
      %76 = vector.load %arg8[%75, %c0_41, %c0_42] : memref<1x1x8xf32, #tpu.memory_space<vmem>>, vector<1x1x8xf32>
      %77 = vector.shape_cast %76 : vector<1x1x8xf32> to vector<1x8xf32>
      %78 = vector.shape_cast %74 : vector<1x8xf32> to vector<1x1x8xf32>
      tpu.vector_store %arg8[%75, %c0_41, %c0_42], %78 {strides = array<i32>} : memref<1x1x8xf32, #tpu.memory_space<vmem>>, vector<1x1x8xf32>,
      %cst_43 = arith.constant 0.000000e+00 : f32
      %79 = vector.broadcast %cst_43 : f32 to vector<1x8xf32>
      %80 = arith.index_cast %arg1 : i32 to index
      %c0_44 = arith.constant 0 : index
      %c0_45 = arith.constant 0 : index
      %81 = vector.load %arg9[%80, %c0_44, %c0_45] : memref<1x1x8xf32, #tpu.memory_space<vmem>>, vector<1x1x8xf32>
      %82 = vector.shape_cast %81 : vector<1x1x8xf32> to vector<1x8xf32>
      %83 = vector.shape_cast %79 : vector<1x8xf32> to vector<1x1x8xf32>
      tpu.vector_store %arg9[%80, %c0_44, %c0_45], %83 {strides = array<i32>} : memref<1x1x8xf32, #tpu.memory_space<vmem>>, vector<1x1x8xf32>,
    } else {
    }
    %cst_24 = arith.constant dense<0xFF800000> : vector<8xf32>
    %37 = vector.multi_reduction <maximumf>, %5, %cst_24 [0] : vector<8x8xf32> to vector<8xf32>
    %38 = vector.shape_cast %37 : vector<8xf32> to vector<1x8xf32>
    %39 = arith.index_cast %arg1 : i32 to index
    %c0_25 = arith.constant 0 : index
    %c0_26 = arith.constant 0 : index
    %40 = vector.load %arg8[%39, %c0_25, %c0_26] : memref<1x1x8xf32, #tpu.memory_space<vmem>>, vector<1x1x8xf32>
    %41 = vector.shape_cast %40 : vector<1x1x8xf32> to vector<1x8xf32>
    %42 = arith.maximumf %41, %38 : vector<1x8xf32>
    %43 = arith.index_cast %arg1 : i32 to index
    %c0_27 = arith.constant 0 : index
    %c0_28 = arith.constant 0 : index
    %44 = vector.load %arg9[%43, %c0_27, %c0_28] : memref<1x1x8xf32, #tpu.memory_space<vmem>>, vector<1x1x8xf32>
    %45 = vector.shape_cast %44 : vector<1x1x8xf32> to vector<1x8xf32>
    %46 = arith.subf %41, %42 : vector<1x8xf32>
    %47 = math.exp %46 : vector<1x8xf32>
    %48 = arith.mulf %45, %47 : vector<1x8xf32>
    %49 = vector.broadcast %42 : vector<1x8xf32> to vector<8x8xf32>
    %50 = arith.subf %5, %49 : vector<8x8xf32>
    %51 = math.exp %50 : vector<8x8xf32>
    %cst_29 = arith.constant dense<0.000000e+00> : vector<8xf32>
    %52 = vector.multi_reduction <add>, %51, %cst_29 [0] : vector<8x8xf32> to vector<8xf32>
    %53 = vector.shape_cast %52 : vector<8xf32> to vector<1x8xf32>
    %54 = arith.addf %48, %53 : vector<1x8xf32>
    %55 = arith.index_cast %arg1 : i32 to index
    %c0_30 = arith.constant 0 : index
    %c0_31 = arith.constant 0 : index
    %56 = vector.load %arg8[%55, %c0_30, %c0_31] : memref<1x1x8xf32, #tpu.memory_space<vmem>>, vector<1x1x8xf32>
    %57 = vector.shape_cast %56 : vector<1x1x8xf32> to vector<1x8xf32>
    %58 = vector.shape_cast %42 : vector<1x8xf32> to vector<1x1x8xf32>
    tpu.vector_store %arg8[%55, %c0_30, %c0_31], %58 {strides = array<i32>} : memref<1x1x8xf32, #tpu.memory_space<vmem>>, vector<1x1x8xf32>,
    %59 = arith.index_cast %arg1 : i32 to index
    %c0_32 = arith.constant 0 : index
    %c0_33 = arith.constant 0 : index
    %60 = vector.load %arg9[%59, %c0_32, %c0_33] : memref<1x1x8xf32, #tpu.memory_space<vmem>>, vector<1x1x8xf32>
    %61 = vector.shape_cast %60 : vector<1x1x8xf32> to vector<1x8xf32>
    %62 = vector.shape_cast %54 : vector<1x8xf32> to vector<1x1x8xf32>
    tpu.vector_store %arg9[%59, %c0_32, %c0_33], %62 {strides = array<i32>} : memref<1x1x8xf32, #tpu.memory_space<vmem>>, vector<1x1x8xf32>,
    %c0_i32_34 = arith.constant 0 : i32
    %63 = arith.cmpi eq, %arg0, %c0_i32_34 : i32
    %64 = arith.extui %63 : i1 to i32
    %c0_i32_35 = arith.constant 0 : i32
    %65 = arith.cmpi ne, %64, %c0_i32_35 : i32
    scf.if %65 {
      %c1 = arith.constant 1 : index
      %74 = memref.load %arg10[%c1] : memref<3xf32, #tpu.memory_space<smem>>
      %75 = math.log %54 : vector<1x8xf32>
      %76 = arith.addf %75, %42 : vector<1x8xf32>
      %77 = vector.shape_cast %76 : vector<1x8xf32> to vector<1x1x8xf32>
      %cst_40 = arith.constant dense<0.000000e+00> : vector<1xf32>
      %78 = vector.multi_reduction <add>, %77, %cst_40 [1, 2] : vector<1x1x8xf32> to vector<1xf32>
      %79 = vector.shape_cast %78 : vector<1xf32> to vector<1x1x1xf32>
      %80 = vector.extract %79[0, 0, 0] : f32 from vector<1x1x1xf32>
      %81 = arith.addf %74, %80 : f32
      %c1_41 = arith.constant 1 : index
      %82 = memref.load %arg10[%c1_41] : memref<3xf32, #tpu.memory_space<smem>>
      memref.store %81, %arg10[%c1_41] : memref<3xf32, #tpu.memory_space<smem>>
    } else {
    }
    %66 = arith.cmpi eq, %arg0, %arg1 : i32
    %67 = arith.extui %66 : i1 to i32
    %c0_i32_36 = arith.constant 0 : i32
    %68 = arith.cmpi ne, %67, %c0_i32_36 : i32
    scf.if %68 {
      %74 = tpu.iota {dimensions = array<i32: 0>} : vector<8x8xi32>
      %75 = tpu.iota {dimensions = array<i32: 1>} : vector<8x8xi32>
      %c2 = arith.constant 2 : index
      %76 = memref.load %arg10[%c2] : memref<3xf32, #tpu.memory_space<smem>>
      %77 = arith.cmpi eq, %74, %75 : vector<8x8xi32>
      %cst_40 = arith.constant 0.000000e+00 : f32
      %78 = vector.broadcast %cst_40 : f32 to vector<8x8xf32>
      %79 = arith.select %77, %5, %78 : vector<8x8xi1>, vector<8x8xf32>
      %80 = vector.shape_cast %79 : vector<8x8xf32> to vector<1x8x8xf32>
      %cst_41 = arith.constant dense<0.000000e+00> : vector<1xf32>
      %81 = vector.multi_reduction <add>, %80, %cst_41 [1, 2] : vector<1x8x8xf32> to vector<1xf32>
      %82 = vector.shape_cast %81 : vector<1xf32> to vector<1x1x1xf32>
      %83 = vector.extract %82[0, 0, 0] : f32 from vector<1x1x1xf32>
      %84 = arith.addf %76, %83 : f32
      %c2_42 = arith.constant 2 : index
      %85 = memref.load %arg10[%c2_42] : memref<3xf32, #tpu.memory_space<smem>>
      memref.store %84, %arg10[%c2_42] : memref<3xf32, #tpu.memory_space<smem>>
    } else {
    }
    %c0_i32_37 = arith.constant 0 : i32
    %69 = arith.cmpi eq, %arg0, %c0_i32_37 : i32
    %c0_i32_38 = arith.constant 0 : i32
    %70 = arith.cmpi eq, %arg1, %c0_i32_38 : i32
    %71 = arith.andi %69, %70 : i1
    %72 = arith.extui %71 : i1 to i32
    %c0_i32_39 = arith.constant 0 : i32
    %73 = arith.cmpi ne, %72, %c0_i32_39 : i32
    scf.if %73 {
      %c0_40 = arith.constant 0 : index
      %74 = memref.load %arg10[%c0_40] : memref<3xf32, #tpu.memory_space<smem>>
      %c1 = arith.constant 1 : index
      %75 = memref.load %arg10[%c1] : memref<3xf32, #tpu.memory_space<smem>>
      %76 = arith.addf %74, %75 : f32
      %c2 = arith.constant 2 : index
      %77 = memref.load %arg10[%c2] : memref<3xf32, #tpu.memory_space<smem>>
      %cst_41 = arith.constant 2.000000e+00 : f32
      %78 = arith.mulf %cst_41, %77 : f32
      %79 = arith.subf %76, %78 : f32
      %cst_42 = arith.constant 1.600000e+01 : f32
      %80 = arith.divf %79, %cst_42 : f32
      %c0_43 = arith.constant 0 : index
      %c0_44 = arith.constant 0 : index
      %81 = memref.load %arg5[%c0_43, %c0_44] : memref<1x1xf32, #tpu.memory_space<smem>>
      memref.store %80, %arg5[%c0_43, %c0_44] : memref<1x1xf32, #tpu.memory_space<smem>>
    } else {
    }
    return
  }
  func.func @transform_0(%arg0: i32, %arg1: i32) -> i32 {
    %c0_i32 = arith.constant 0 : i32
    %c0_i32_0 = arith.constant 0 : i32
    return %c0_i32 : i32
  }
  func.func @transform_1(%arg0: i32, %arg1: i32) -> (i32, i32) {
    %c0_i32 = arith.constant 0 : i32
    %c0_i32_0 = arith.constant 0 : i32
    return %arg0, %c0_i32 : i32, i32
  }
  func.func @transform_2(%arg0: i32, %arg1: i32) -> (i32, i32) {
    %c0_i32 = arith.constant 0 : i32
    %c0_i32_0 = arith.constant 0 : i32
    return %arg1, %c0_i32 : i32, i32
  }
  func.func @transform_3(%arg0: i32, %arg1: i32) -> (i32, i32) {
    %c0_i32 = arith.constant 0 : i32
    %c0_i32_0 = arith.constant 0 : i32
    %c0_i32_1 = arith.constant 0 : i32
    return %c0_i32, %c0_i32_0 : i32, i32
  }
}

</mosaic_0001>

<llo_original>
// kernel: tpu_custom_call.1
$region0: #{tpu_custom_call.1}
  #allocation0 [shape = 'u32[]', space=smem, size = 0x4, offset = 0x4, fixed_abs, tag = 'smem constant byte address 0x4 - core index']
  #allocation1 [shape = 'u32[144,128]{1,0:T(1,128)}', space=vmem, size = 0x12000, scoped, tag = 'internal scratch']
  #allocation2 [shape = 'f32[8,1]{1,0:T(8,128)}', space=vmem, size = 0x1000, scoped, tag = 'scratch operand']
  #allocation3 [shape = 'f32[8,1]{1,0:T(8,128)}', space=vmem, size = 0x1000, scoped, tag = 'scratch operand']
  #allocation4 [shape = 'f32[1,1,8]{2,1,0:T(1,128)}', space=vmem, size = 0x200, scoped, tag = 'scratch operand']
  #allocation5 [shape = 'f32[1,1,8]{2,1,0:T(1,128)}', space=vmem, size = 0x200, scoped, tag = 'scratch operand']
  #allocation6 [shape = 'f32[3]{0:T(128)}', space=smem, size = 0x200, scoped, tag = 'scratch operand']
  #allocation7 [shape = 'f32[1]{0:T(128)S(6)}', space=smem, size = 0x200, scoped, tag = 'scoped memory for tpu_custom_call.1']
  %s0 = inlined_call_operand.<no memory space> [shape: f32[1], index: 0, kind: input, shape index: {}]
  %s1 = inlined_call_operand.hbm [shape: f32[8,32], index: 1, kind: input, shape index: {}]
  %s2 = inlined_call_operand.hbm [shape: f32[8,32], index: 2, kind: input, shape index: {}]
  %s3 = inlined_call_operand.hbm [shape: f32[1,1], index: 3, kind: output, shape index: {}]
  %s4 = sld [smem:[#allocation0]]
  $region58: #{tpu_custom_call.1} parent=0
    _
  %s6 = ssub.s32 1, %s4
  %s7 = scalar_select 0, %s6, %s4
  %8 = sst [smem:[#allocation7]] %s0
  $region1: #{tpu_custom_call.1} parent=0
    #allocation8 [shape = 'u8[4096]{0}', space=vmem, size = 0x1000, scoped, tag = 'input window, operand 1, single buffered']
    #allocation9 [shape = 's32[1]{0}', space=sflag, size = 0x4, scoped, tag = 'scoped memory for tpu_custom_call.1']
    #allocation10 [shape = 's32[1]{0}', space=sflag, size = 0x4, scoped, tag = 'scoped memory for tpu_custom_call.1']
    #allocation11 [shape = 'u8[4096]{0}', space=vmem, size = 0x1000, scoped, tag = 'input window, operand 2, single buffered']
    #allocation12 [shape = 's32[1]{0}', space=sflag, size = 0x4, scoped, tag = 'scoped memory for tpu_custom_call.1']
    #allocation13 [shape = 'u8[512]{0}', space=smem, size = 0x200, scoped, tag = 'output window, operand 0, single buffered']
    %9 = vsyncpa [#allocation9], 0
    %10 = vsyncpa [#allocation12], 0
    %11 = vsyncpa [#allocation10], 0
    // Predicated region
    $region2: #{tpu_custom_call.1} parent=1 // pred_check
      _
    $region3: #{tpu_custom_call.1} parent=1 // pred_check_branch
      %13 = sbr.rel (0) target = $region5
    $region4: #{tpu_custom_call.1} parent=1 // pred_region
      _
    $region5: #{tpu_custom_call.1} parent=1 // pred_fallthru
      _
    // Predicated region
    $region6: #{tpu_custom_call.1} parent=1 // pred_check
      _
    $region7: #{tpu_custom_call.1} parent=1 // pred_check_branch
      %15 = sbr.rel (0) target = $region9
    $region8: #{tpu_custom_call.1} parent=1 // pred_region
      %s17 = ssub.s32 128, 128
      %18 = vsyncadd [#allocation9], %s17
      %s20 = sshll.u32 [#allocation8], 4
      %s21 = int_to_ptr.vmem [resolvable:$true] %s20
      %23 = dma.hbm_to_vmem [thread:$0]  %s1, 128, %s21, [#allocation9]
    $region9: #{tpu_custom_call.1} parent=1 // pred_fallthru
      _
    // Predicated region
    $region10: #{tpu_custom_call.1} parent=1 // pred_check
      _
    $region11: #{tpu_custom_call.1} parent=1 // pred_check_branch
      %25 = sbr.rel (0) target = $region13
    $region12: #{tpu_custom_call.1} parent=1 // pred_region
      %s27 = ssub.s32 128, 128
      %28 = vsyncadd [#allocation12], %s27
      %s30 = sshll.u32 [#allocation11], 4
      %s31 = int_to_ptr.vmem [resolvable:$true] %s30
      %33 = dma.hbm_to_vmem [thread:$0]  %s2, 128, %s31, [#allocation12]
    $region13: #{tpu_custom_call.1} parent=1 // pred_fallthru
      _
    // Predicated region
    $region14: #{tpu_custom_call.1} parent=1 // pred_check
      _
    $region15: #{tpu_custom_call.1} parent=1 // pred_check_branch
      %35 = sbr.rel (0) target = $region17
    $region16: #{tpu_custom_call.1} parent=1 // pred_region
      %36 = dma.done [#allocation9], 128
    $region17: #{tpu_custom_call.1} parent=1 // pred_fallthru
      _
    // Predicated region
    $region18: #{tpu_custom_call.1} parent=1 // pred_check
      _
    $region19: #{tpu_custom_call.1} parent=1 // pred_check_branch
      %38 = sbr.rel (0) target = $region21
    $region20: #{tpu_custom_call.1} parent=1 // pred_region
      %39 = dma.done [#allocation12], 128
    $region21: #{tpu_custom_call.1} parent=1 // pred_fallthru
      _
    %v40 = vld [vmem:[#allocation8] sm:$0xff]
    %v41 = vld [vmem:[#allocation11] sm:$0xff]
    %vm42 = vcmask 261120
    %v44 = vsel %vm42, %v40, 0
    %v47 = vsel %vm42, %v41, 0
    %49 = vmatprep.subr.mxu0 0.0
    %50 = vmatpush1.xpose.msra.mxu0 0.0
    %51 = vmatprep.subr.mxu0 0.0
    %52 = vmatpush1.xpose.msra.mxu0 0.0
    %53 = vmatprep.subr.mxu0 0.0
    %54 = vmatpush1.xpose.msra.mxu0 0.0
    %55 = vmatprep.subr.mxu0 0.0
    %56 = vmatpush1.xpose.msra.mxu0 0.0
    %57 = vmatprep.subr.mxu0 0.0
    %58 = vmatpush1.xpose.msra.mxu0 0.0
    %59 = vmatprep.subr.mxu0 0.0
    %60 = vmatpush1.xpose.msra.mxu0 0.0
    %61 = vmatprep.subr.mxu0 0.0
    %62 = vmatpush1.xpose.msra.mxu0 0.0
    %63 = vmatprep.subr.mxu0 0.0
    %64 = vmatpush1.xpose.msra.mxu0 0.0
    %65 = vmatprep.subr.mxu0 0.0
    %66 = vmatpush1.xpose.msra.mxu0 0.0
    %67 = vmatprep.subr.mxu0 0.0
    %68 = vmatpush1.xpose.msra.mxu0 0.0
    %69 = vmatprep.subr.mxu0 0.0
    %70 = vmatpush1.xpose.msra.mxu0 0.0
    %71 = vmatprep.subr.mxu0 0.0
    %72 = vmatpush1.xpose.msra.mxu0 0.0
    %73 = vmatprep.subr.mxu0 0.0
    %74 = vmatpush1.xpose.msra.mxu0 0.0
    %75 = vmatprep.subr.mxu0 0.0
    %76 = vmatpush1.xpose.msra.mxu0 0.0
    %77 = vmatprep.subr.mxu0 0.0
    %78 = vmatpush1.xpose.msra.mxu0 0.0
    %79 = vmatprep.subr.mxu0 0.0
    %80 = vmatpush1.xpose.msra.mxu0 %v47
    %81 = vmatprep.subr.mxu0 0.0
    %82 = vmatpush2.xpose.msra.mxu0 0.0
    %83 = vmatprep.subr.mxu0 0.0
    %84 = vmatpush2.xpose.msra.mxu0 0.0
    %85 = vmatprep.subr.mxu0 0.0
    %86 = vmatpush2.xpose.msra.mxu0 0.0
    %87 = vmatprep.subr.mxu0 0.0
    %88 = vmatpush2.xpose.msra.mxu0 0.0
    %89 = vmatprep.subr.mxu0 0.0
    %90 = vmatpush2.xpose.msra.mxu0 0.0
    %91 = vmatprep.subr.mxu0 0.0
    %92 = vmatpush2.xpose.msra.mxu0 0.0
    %93 = vmatprep.subr.mxu0 0.0
    %94 = vmatpush2.xpose.msra.mxu0 0.0
    %95 = vmatprep.subr.mxu0 0.0
    %96 = vmatpush2.xpose.msra.mxu0 0.0
    %97 = vmatprep.subr.mxu0 0.0
    %98 = vmatpush2.xpose.msra.mxu0 0.0
    %99 = vmatprep.subr.mxu0 0.0
    %100 = vmatpush2.xpose.msra.mxu0 0.0
    %101 = vmatprep.subr.mxu0 0.0
    %102 = vmatpush2.xpose.msra.mxu0 0.0
    %103 = vmatprep.subr.mxu0 0.0
    %104 = vmatpush2.xpose.msra.mxu0 0.0
    %105 = vmatprep.subr.mxu0 0.0
    %106 = vmatpush2.xpose.msra.mxu0 0.0
    %107 = vmatprep.subr.mxu0 0.0
    %108 = vmatpush2.xpose.msra.mxu0 0.0
    %109 = vmatprep.subr.mxu0 0.0
    %110 = vmatpush2.xpose.msra.mxu0 0.0
    %111 = vmatprep.subr.mxu0 0.0
    %112 = vmatpush2.xpose.msra.mxu0 0.0
    %113 = vmatprep.mubr.f32.mxu0 0.0
    %114 = vmatmul.mubr.f32.gmra.mxu0 %v44
    %v115 = vpop.f32.mrf.mxu0
    %v116 = vadd.f32 0.0, %v115
    %v117 = vpop.f32.mrf.mxu0
    %118 = vdwg.mxu0
    %s119 = sld [smem:[#allocation7]]
    %v120 = vstv %s119
    %v121 = vmul.f32 %v116, %v120
    %p122 = scmp.eq.s32.totalorder 0, 0
    %p123 = scmp.eq.s32.totalorder 0, 0
    %p124 = pnand %p122, %p123
    %p125 = pneg %p124
    // Predicated region
    $region22: #{tpu_custom_call.1} parent=1 // pred_check
      _
    $region23: #{tpu_custom_call.1} parent=1 // pred_check_branch
      %127 = sbr.rel (%p124) target = $region25
    $region24: #{tpu_custom_call.1} parent=1 // pred_region
      %s128 = scalar_lea.smem [#allocation6], 0
      %129 = sst [smem:[%s128]] 0.0
      %s130 = scalar_lea.smem [#allocation6], 1
      %131 = sst [smem:[%s130]] 0.0
      %s132 = scalar_lea.smem [#allocation6], 2
      %133 = sst [smem:[%s132]] 0.0
      %s134 = scalar_lea.smem [#allocation13], 0
      %135 = sst [smem:[%s134]] 0.0
    $region25: #{tpu_custom_call.1} parent=1 // pred_fallthru
      _
    // Predicated region
    $region26: #{tpu_custom_call.1} parent=1 // pred_check
      %p136 = pneg %p123
    $region27: #{tpu_custom_call.1} parent=1 // pred_check_branch
      %138 = sbr.rel (%p136) target = $region29
    $region28: #{tpu_custom_call.1} parent=1 // pred_region
      %vm139 = vcmask 7168
      %140 = vst.msk [vmem:[#allocation2] sm:$0xff] %vm139, -inf
      %141 = vst.msk [vmem:[#allocation3] sm:$0xff] %vm139, 0.0
    $region29: #{tpu_custom_call.1} parent=1 // pred_fallthru
      _
    %vm142 = vcmask 64512
    %v143 = vsel %vm142, %v121, -inf
    %144 = vmax.xlane.f32.xlu0 %v143
    %v145 = vpop.xlane.xlu0 %144
    %v146 = vld [vmem:[#allocation2] sm:$0xff]
    %v147 = vmax.f32 %v146, %v145
    %v148 = vld [vmem:[#allocation3] sm:$0xff]
    %v149 = vsub.f32 %v146, %v147
    %v150 = vmul.f32 %v149, 1.442695
    %v151 = vpow.pop %v150
    %v152 = vmul.f32 %v148, %v151
    %154 = vset.pattern.permute.xlu0 0
    %155 = vperm.xlu0 %154, %v147
    %v156 = vpop.permute.xlu0 %155
    %v158 = vsub.f32 %v121, %v156
    %v159 = vmul.f32 %v158, 1.442695
    %v160 = vpow.pop %v159
    %v161 = vsel %vm142, %v160, 0.0
    %162 = vadd.xlane.f32.xlu0 %v161
    %v163 = vpop.xlane.xlu0 %162
    %v164 = vadd.f32 %v152, %v163
    %vm165 = vcmask 7168
    %166 = vst.msk [vmem:[#allocation3] sm:$0xff] %vm165, %v164
    %167 = vst.msk [vmem:[#allocation2] sm:$0xff] %vm165, %v147
    // Predicated region
    $region30: #{tpu_custom_call.1} parent=1 // pred_check
      %p168 = pneg %p123
    $region31: #{tpu_custom_call.1} parent=1 // pred_check_branch
      %170 = sbr.rel (%p168) target = $region33
    $region32: #{tpu_custom_call.1} parent=1 // pred_region
      %s171 = sld [smem:[#allocation6]]
      %v172 = vld [vmem:[#allocation3] sm:$0xff]
      %v173 = vlog2.pop %v172
      %v174 = vmul.f32 %v173, 0.6931472
      %v175 = vld [vmem:[#allocation2] sm:$0xff]
      %v176 = vadd.f32 %v174, %v175
      %v177 = vsel %vm165, %v176, 0.0
      %178 = vadd.xlane.f32.xlu0 %v177
      %v179 = vpop.xlane.xlu0 %178
      %v180 = vrot.slane %v179, 4
      %v181 = vadd.f32 %v179, %v180
      %v182 = vrot.slane %v181, 2
      %v183 = vadd.f32 %v181, %v182
      %v184 = vrot.slane %v183, 1
      %v185 = vadd.f32 %v183, %v184
      %s186 = vtos %v185
      %s187 = sadd.f32 %s171, %s186
      %s188 = scalar_lea.smem [#allocation6], 0
      %189 = sst [smem:[%s188]] %s187
    $region33: #{tpu_custom_call.1} parent=1 // pred_fallthru
      _
    // Predicated region
    $region34: #{tpu_custom_call.1} parent=1 // pred_check
      %p190 = pneg %p122
    $region35: #{tpu_custom_call.1} parent=1 // pred_check_branch
      %192 = sbr.rel (%p190) target = $region37
    $region36: #{tpu_custom_call.1} parent=1 // pred_region
      %vm193 = vcmask 57344
      %194 = vst.msk [vmem:[#allocation4] sm:$0x1] %vm193, -inf
      %195 = vst.msk [vmem:[#allocation5] sm:$0x1] %vm193, 0.0
    $region37: #{tpu_custom_call.1} parent=1 // pred_fallthru
      _
    %v196 = vrot.slane %v143, 4
    %v197 = vmax.f32 %v143, %v196
    %v198 = vrot.slane %v197, 2
    %v199 = vmax.f32 %v197, %v198
    %v200 = vrot.slane %v199, 1
    %v201 = vmax.f32 %v199, %v200
    %v202 = vld [vmem:[#allocation4] sm:$0x1]
    %v203 = vmax.f32 %v202, %v201
    %v204 = vld [vmem:[#allocation5] sm:$0x1]
    %v205 = vsub.f32 %v202, %v203
    %v206 = vmul.f32 %v205, 1.442695
    %v207 = vpow.pop %v206
    %v208 = vmul.f32 %v204, %v207
    %v210 = vlaneseq
    %v211 = vshrl.u32 %v210, 7
    %v212 = vsub.s32 0, %v211
    %v213 = vrot.slane %v203, %v212
    %v215 = vsub.f32 %v121, %v213
    %v216 = vmul.f32 %v215, 1.442695
    %v217 = vpow.pop %v216
    %v218 = vsel %vm142, %v217, 0.0
    %v219 = vrot.slane %v218, 4
    %v220 = vadd.f32 %v218, %v219
    %v221 = vrot.slane %v220, 2
    %v222 = vadd.f32 %v220, %v221
    %v223 = vrot.slane %v222, 1
    %v224 = vadd.f32 %v222, %v223
    %v225 = vadd.f32 %v208, %v224
    %vm226 = vcmask 57344
    %227 = vst.msk [vmem:[#allocation4] sm:$0x1] %vm226, %v203
    %228 = vst.msk [vmem:[#allocation5] sm:$0x1] %vm226, %v225
    // Predicated region
    $region38: #{tpu_custom_call.1} parent=1 // pred_check
      %p229 = pneg %p122
    $region39: #{tpu_custom_call.1} parent=1 // pred_check_branch
      %231 = sbr.rel (%p229) target = $region41
    $region40: #{tpu_custom_call.1} parent=1 // pred_region
      %s232 = sld [smem:[#allocation6 + $0x1]]
      %v233 = vlog2.pop %v225
      %v234 = vmul.f32 %v233, 0.6931472
      %v235 = vadd.f32 %v234, %v203
      %v236 = vsel %vm226, %v235, 0.0
      %237 = vadd.xlane.f32.xlu0 %v236
      %v238 = vpop.xlane.xlu0 %237
      %v239 = vrot.slane %v238, 4
      %v240 = vadd.f32 %v238, %v239
      %v241 = vrot.slane %v240, 2
      %v242 = vadd.f32 %v240, %v241
      %v243 = vrot.slane %v242, 1
      %v244 = vadd.f32 %v242, %v243
      %s245 = vtos %v244
      %s246 = sadd.f32 %s232, %s245
      %s247 = scalar_lea.smem [#allocation6], 1
      %248 = sst [smem:[%s247]] %s246
    $region41: #{tpu_custom_call.1} parent=1 // pred_fallthru
      _
    %p249 = scmp.eq.s32.totalorder 0, 0
    // Predicated region
    $region42: #{tpu_custom_call.1} parent=1 // pred_check
      %p250 = pneg %p249
    $region43: #{tpu_custom_call.1} parent=1 // pred_check_branch
      %252 = sbr.rel (%p250) target = $region45
    $region44: #{tpu_custom_call.1} parent=1 // pred_region
      %v253 = vlaneseq
      %v254 = vshrl.u32 %v253, 7
      %v255 = vlaneseq
      %v256 = vand.u32 %v255, 127
      %s257 = sld [smem:[#allocation6 + $0x2]]
      %vm258 = vcmp.eq.s32.totalorder %v254, %v256
      %v259 = vsel %vm258, %v121, 0.0
      %v260 = vsel %vm142, %v259, 0.0
      %261 = vadd.xlane.f32.xlu0 %v260
      %v262 = vpop.xlane.xlu0 %261
      %v263 = vrot.slane %v262, 4
      %v264 = vadd.f32 %v262, %v263
      %v265 = vrot.slane %v264, 2
      %v266 = vadd.f32 %v264, %v265
      %v267 = vrot.slane %v266, 1
      %v268 = vadd.f32 %v266, %v267
      %s269 = vtos %v268
      %s270 = sadd.f32 %s257, %s269
      %s271 = scalar_lea.smem [#allocation6], 2
      %272 = sst [smem:[%s271]] %s270
    $region45: #{tpu_custom_call.1} parent=1 // pred_fallthru
      _
    // Predicated region
    $region46: #{tpu_custom_call.1} parent=1 // pred_check
      _
    $region47: #{tpu_custom_call.1} parent=1 // pred_check_branch
      %274 = sbr.rel (%p124) target = $region49
    $region48: #{tpu_custom_call.1} parent=1 // pred_region
      %s275 = sld [smem:[#allocation6]]
      %s276 = sld [smem:[#allocation6 + $0x1]]
      %s277 = sadd.f32 %s275, %s276
      %s278 = sld [smem:[#allocation6 + $0x2]]
      %s279 = smul.f32 %s278, 2.0
      %s280 = ssub.f32 %s277, %s279
      %v281 = vrcp.pop 16.0
      %s282 = vtos %v281
      %s283 = smul.f32 %s280, %s282
      %s284 = scalar_lea.smem [#allocation13], 0
      %285 = sst [smem:[%s284]] %s283
    $region49: #{tpu_custom_call.1} parent=1 // pred_fallthru
      _
    // Predicated region
    $region50: #{tpu_custom_call.1} parent=1 // pred_check
      _
    $region51: #{tpu_custom_call.1} parent=1 // pred_check_branch
      %287 = sbr.rel (0) target = $region53
    $region52: #{tpu_custom_call.1} parent=1 // pred_region
      %s289 = ssub.s32 16, 16
      %290 = vsyncadd [#allocation10], %s289
      %293 = dma.smem_to_hbm [#allocation13], 16, %s3, [#allocation10]
    $region53: #{tpu_custom_call.1} parent=1 // pred_fallthru
      _
    // Predicated region
    $region54: #{tpu_custom_call.1} parent=1 // pred_check
      _
    $region55: #{tpu_custom_call.1} parent=1 // pred_check_branch
      %295 = sbr.rel (0) target = $region57
    $region56: #{tpu_custom_call.1} parent=1 // pred_region
      %296 = dma.done [#allocation10], 16
    $region57: #{tpu_custom_call.1} parent=1 // pred_fallthru
      _
    %297 = sfence
    %298 = vsyncpa [#allocation9], 1
    %299 = vsyncpa [#allocation12], 1
    %300 = vsyncpa [#allocation10], 1

</llo_original>
